<compile_context>
chip_gen: v7x
topology: tpu7x:2x2x1
jax: 0.10.0
libtpu: 0.0.40
codegen_flags: <defaults>
</compile_context>

<pallas_src>
import functools

import jax
import jax.numpy as jnp
from jax.experimental import pallas as pl
from jax.experimental.pallas import tpu as pltpu

CHN_MID = 32
EPS = 0.1
NEG_SLOPE = 0.2


def _dist2logit_kernel(d_ref,
                       w1a_ref, w1b_ref, w1r0_ref, w1r1_ref, b1_ref,
                       w2_ref, b2_ref, w3_ref, b3_ref,
                       o_ref, *, act_dtype):
    # d_ref: (2, tp) lane-dense pixel tile, row 0 = d0, row 1 = d1 (f32).
    d = d_ref[...]                                        # (2, tp)

    # Ratio features: one dense EUP reciprocal over the stacked slab, then
    # slice rows (d + EPS >= EPS > 0 so the approx reciprocal is safe).
    inv = pl.reciprocal(d + EPS, approx=True)             # (2, tp)
    d0 = d[0:1, :]
    d1 = d[1:2, :]
    r0 = d0 * inv[1:2, :]                                 # d0 / (d1 + eps)
    r1 = d1 * inv[0:1, :]                                 # d1 / (d0 + eps)

    d0 = d0.astype(act_dtype)
    d1 = d1.astype(act_dtype)
    r0 = r0.astype(act_dtype)
    r1 = r1.astype(act_dtype)

    def leaky(v):
        return jnp.maximum(v, v * jnp.asarray(NEG_SLOPE, v.dtype))

    # Layer 1: folded 1x1 conv (d0-d1 absorbed) as rank-1 broadcast MACs (VPU).
    # Weight columns arrive pre-split as (chn, 1) arrays in act_dtype.
    h = (w1a_ref[...] * d0 + w1b_ref[...] * d1 +
         w1r0_ref[...] * r0 + w1r1_ref[...] * r1 + b1_ref[...])      # (chn, tp)
    h = leaky(h)

    # Layer 2: 1x1 conv = (chn, chn) @ (chn, tp) on the MXU, bf16 operands,
    # f32 accumulation.
    h = jnp.dot(w2_ref[...], h.astype(jnp.bfloat16),
                preferred_element_type=jnp.float32) + b2_ref[...]    # (chn, tp) f32
    h = leaky(h.astype(act_dtype))

    # Layer 3: (1, chn) @ (chn, tp) -> lane-dense (1, tp) logit, then sigmoid.
    y = jnp.dot(w3_ref[...], h.astype(jnp.bfloat16),
                preferred_element_type=jnp.float32) + b3_ref[...]    # (1, tp) f32
    o_ref[...] = jax.nn.sigmoid(y).astype(o_ref.dtype)


def _round_up(x, m):
    return ((x + m - 1) // m) * m


def _choose_tile(M, tp_max):
    """Pick a lane-dense pixel tile size and grid: tp multiple of 128,
    and >= 2 grid steps whenever there is >1 tile worth of data (megacore)."""
    tp_eff = _round_up(min(tp_max, _round_up(M, 128)), 128)
    while _round_up(M, tp_eff) // tp_eff < 2 and tp_eff > 128:
        tp_eff = _round_up((tp_eff + 1) // 2, 128)
    Mp = _round_up(M, tp_eff)
    return tp_eff, Mp // tp_eff, Mp


@functools.lru_cache(maxsize=None)
def _device_defaults():
    """Generation-aware defaults: tile size, bf16 activation path, VMEM limit."""
    try:
        kind = jax.devices()[0].device_kind.lower()
    except Exception:  # pragma: no cover - defensive
        kind = ""
    is_v7 = "v7" in kind
    old_gen = any(t in kind for t in ("v2", "v3", "v4", "v5"))
    tp = 8192 if is_v7 else 32768            # smaller tiles -> even megacore split on v7x
    bf16_act = not old_gen                   # bf16 VALU/EUP only on v6e/v7x
    vmem = (48 if is_v7 else 64) * 1024 * 1024
    return tp, bf16_act, vmem


@functools.partial(jax.jit, static_argnames=("tp", "bf16_act", "vmem_limit_bytes"))
def _dist2logit_impl(d0, d1, params, *, tp, bf16_act, vmem_limit_bytes):
    w1, b1, w2, b2, w3, b3 = params
    chn = w2.shape[0]
    N, C, H, W = d0.shape
    assert C == 1
    M = N * H * W

    tp_eff, grid, Mp = _choose_tile(M, tp)
    act_dtype = jnp.bfloat16 if bf16_act else jnp.float32

    # ---- channels-first, lane-dense, stacked + zero-padded pixel axis ------
    # Padded pixels (d0 = d1 = 0) produce finite values and are cropped below.
    d = jnp.concatenate([d0.reshape(1, M), d1.reshape(1, M)], axis=0)   # (2, M)
    d = jnp.pad(d, ((0, 0), (0, Mp - M)))                               # (2, Mp)

    # ---- fold the (d0 - d1) feature into layer-1 weights, pre-split cols ---
    # w1 is (5, chn) with feature rows [d0, d1, d0-d1, d0/(d1+eps), d1/(d0+eps)].
    w1a = (w1[0] + w1[2]).reshape(chn, 1).astype(act_dtype)
    w1b = (w1[1] - w1[2]).reshape(chn, 1).astype(act_dtype)
    w1r0 = w1[3].reshape(chn, 1).astype(act_dtype)
    w1r1 = w1[4].reshape(chn, 1).astype(act_dtype)
    b1c = b1.reshape(chn, 1).astype(act_dtype)
    w2c = w2.T.astype(jnp.bfloat16)          # (chn_out, chn_in) so layer 2 is W @ X
    b2c = b2.reshape(chn, 1)                 # f32 (added to the f32 accumulator)
    w3c = w3.T.astype(jnp.bfloat16)          # (1, chn)
    b3c = b3.reshape(1, 1)                   # f32

    full = lambda a: pl.BlockSpec(a.shape, lambda i: (0, 0))

    out_flat = pl.pallas_call(
        functools.partial(_dist2logit_kernel, act_dtype=act_dtype),
        out_shape=jax.ShapeDtypeStruct((1, Mp), jnp.float32),
        grid_spec=pltpu.PrefetchScalarGridSpec(
            num_scalar_prefetch=0,
            grid=(grid,),
            in_specs=[
                pl.BlockSpec((2, tp_eff), lambda i: (0, i)),   # stacked [d0; d1]
                full(w1a), full(w1b), full(w1r0), full(w1r1), full(b1c),
                full(w2c), full(b2c),
                full(w3c), full(b3c),
            ],
            out_specs=pl.BlockSpec((1, tp_eff), lambda i: (0, i)),
        ),
        compiler_params=pltpu.CompilerParams(
            dimension_semantics=("parallel",),
            vmem_limit_bytes=vmem_limit_bytes,
        ),
    )(d, w1a, w1b, w1r0, w1r1, b1c, w2c, b2c, w3c, b3c)

    return out_flat[:, :M].reshape(N, 1, H, W)


def dist2logit(d0, d1, params, tp=None, bf16_act=None, vmem_limit_bytes=None):
    """d0, d1: (N, 1, H, W) float32 (NCHW, like the PyTorch module)."""
    tp_d, act_d, vmem_d = _device_defaults()
    return _dist2logit_impl(
        d0, d1, params,
        tp=tp_d if tp is None else tp,
        bf16_act=act_d if bf16_act is None else bf16_act,
        vmem_limit_bytes=vmem_d if vmem_limit_bytes is None else vmem_limit_bytes,
    )


def init_params(key, chn_mid=CHN_MID):
    """Deterministic synthetic weights matching the Conv2d 1x1 shapes.

    PyTorch Conv2d weight (out, in, 1, 1) is stored here transposed as
    (in, out) so the per-pixel MLP is x @ W + b."""
    k1, k2, k3, k4, k5, k6 = jax.random.split(key, 6)
    w1 = jax.random.normal(k1, (5, chn_mid), jnp.float32) * 0.2
    b1 = jax.random.normal(k2, (1, chn_mid), jnp.float32) * 0.05
    w2 = jax.random.normal(k3, (chn_mid, chn_mid), jnp.float32) * 0.1
    b2 = jax.random.normal(k4, (1, chn_mid), jnp.float32) * 0.05
    w3 = jax.random.normal(k5, (chn_mid, 1), jnp.float32) * 0.1
    b3 = jax.random.normal(k6, (1, 1), jnp.float32) * 0.05
    return (w1, b1, w2, b2, w3, b3)


def dist2logit_ref(d0, d1, params):
    """Pure-JAX f32 reference faithful to the PyTorch module."""
    w1, b1, w2, b2, w3, b3 = params
    N, _, H, W = d0.shape
    a = d0.reshape(-1, 1)
    b = d1.reshape(-1, 1)
    x = jnp.concatenate([a, b, a - b, a / (b + EPS), b / (a + EPS)], axis=-1)
    h = x @ w1 + b1
    h = jnp.where(h > 0, h, NEG_SLOPE * h)
    h = h @ w2 + b2
    h = jnp.where(h > 0, h, NEG_SLOPE * h)
    y = h @ w3 + b3
    return jax.nn.sigmoid(y).reshape(N, 1, H, W)


if __name__ == "__main__":
    key = jax.random.PRNGKey(0)
    kp, kd0, kd1 = jax.random.split(key, 3)

    N, H, W = 2, 16, 16
    # Distances are non-negative in LPIPS; use abs of normals.
    d0 = jnp.abs(jax.random.normal(kd0, (N, 1, H, W), jnp.float32))
    d1 = jnp.abs(jax.random.normal(kd1, (N, 1, H, W), jnp.float32))

    params = init_params(kp)

    out = jax.block_until_ready(dist2logit(d0, d1, params))
    ref = dist2logit_ref(d0, d1, params)

    assert out.shape == (N, 1, H, W)
    # Tolerance covers the approximate EUP reciprocal plus the bf16 MXU
    # operands (and bf16 VPU path on v6e/v7x); post-sigmoid error is well
    # inside 2e-2 against the f32 reference.
    max_err = float(jnp.max(jnp.abs(out - ref)))
    assert jnp.allclose(out, ref, atol=2e-2, rtol=2e-2), (
        f"mismatch vs reference (max abs err {max_err})")

    print("KERNEL_OK")
</pallas_src>

<mosaic_0001>
module attributes {stable_mosaic.version = 11 : i64} {
  func.func @_dist2logit_kernel(%arg0: i32, %arg1: memref<2x256xf32, #tpu.memory_space<vmem>>, %arg2: memref<32x1xbf16, #tpu.memory_space<vmem>>, %arg3: memref<32x1xbf16, #tpu.memory_space<vmem>>, %arg4: memref<32x1xbf16, #tpu.memory_space<vmem>>, %arg5: memref<32x1xbf16, #tpu.memory_space<vmem>>, %arg6: memref<32x1xbf16, #tpu.memory_space<vmem>>, %arg7: memref<32x32xbf16, #tpu.memory_space<vmem>>, %arg8: memref<32x1xf32, #tpu.memory_space<vmem>>, %arg9: memref<1x32xbf16, #tpu.memory_space<vmem>>, %arg10: memref<1x1xf32, #tpu.memory_space<vmem>>, %arg11: memref<1x256xf32, #tpu.memory_space<vmem>>) attributes {dimension_semantics = [#tpu.dimension_semantics<parallel>], iteration_bounds = array<i64: 2>, scalar_prefetch = 0 : i64, scratch_operands = 0 : i64, tpu.core_type = #tpu.core_type<tc>, window_params = [{transform_indices = @transform_0, window_bounds = array<i64: 2, 256>}, {pipeline_mode = #tpu.pipeline_mode<synchronous>, transform_indices = @transform_1, window_bounds = array<i64: 32, 1>}, {pipeline_mode = #tpu.pipeline_mode<synchronous>, transform_indices = @transform_2, window_bounds = array<i64: 32, 1>}, {pipeline_mode = #tpu.pipeline_mode<synchronous>, transform_indices = @transform_3, window_bounds = array<i64: 32, 1>}, {pipeline_mode = #tpu.pipeline_mode<synchronous>, transform_indices = @transform_4, window_bounds = array<i64: 32, 1>}, {pipeline_mode = #tpu.pipeline_mode<synchronous>, transform_indices = @transform_5, window_bounds = array<i64: 32, 1>}, {pipeline_mode = #tpu.pipeline_mode<synchronous>, transform_indices = @transform_6, window_bounds = array<i64: 32, 32>}, {pipeline_mode = #tpu.pipeline_mode<synchronous>, transform_indices = @transform_7, window_bounds = array<i64: 32, 1>}, {pipeline_mode = #tpu.pipeline_mode<synchronous>, transform_indices = @transform_8, window_bounds = array<i64: 1, 32>}, {pipeline_mode = #tpu.pipeline_mode<synchronous>, transform_indices = @transform_9, window_bounds = array<i64: 1, 1>}, {transform_indices = @transform_10, window_bounds = array<i64: 1, 256>}]} {
    %c0 = arith.constant 0 : index
    %c0_0 = arith.constant 0 : index
    %0 = vector.load %arg1[%c0, %c0_0] : memref<2x256xf32, #tpu.memory_space<vmem>>, vector<2x256xf32>
    %cst = arith.constant 1.000000e-01 : f32
    %1 = vector.broadcast %cst : f32 to vector<2x256xf32>
    %2 = arith.addf %0, %1 : vector<2x256xf32>
    %3 = tpu.reciprocal %2 {approx = true} : vector<2x256xf32> -> vector<2x256xf32>
    %4 = vector.extract_strided_slice %0 {offsets = [0, 0], sizes = [1, 256], strides = [1, 1]} : vector<2x256xf32> to vector<1x256xf32>
    %5 = vector.extract_strided_slice %0 {offsets = [1, 0], sizes = [1, 256], strides = [1, 1]} : vector<2x256xf32> to vector<1x256xf32>
    %6 = vector.extract_strided_slice %3 {offsets = [1, 0], sizes = [1, 256], strides = [1, 1]} : vector<2x256xf32> to vector<1x256xf32>
    %7 = arith.mulf %4, %6 : vector<1x256xf32>
    %8 = vector.extract_strided_slice %3 {offsets = [0, 0], sizes = [1, 256], strides = [1, 1]} : vector<2x256xf32> to vector<1x256xf32>
    %9 = arith.mulf %5, %8 : vector<1x256xf32>
    %10 = arith.truncf %4 : vector<1x256xf32> to vector<1x256xbf16>
    %11 = arith.truncf %5 : vector<1x256xf32> to vector<1x256xbf16>
    %12 = arith.truncf %7 : vector<1x256xf32> to vector<1x256xbf16>
    %13 = arith.truncf %9 : vector<1x256xf32> to vector<1x256xbf16>
    %c0_1 = arith.constant 0 : index
    %c0_2 = arith.constant 0 : index
    %14 = vector.load %arg2[%c0_1, %c0_2] : memref<32x1xbf16, #tpu.memory_space<vmem>>, vector<32x1xbf16>
    %15 = vector.broadcast %14 : vector<32x1xbf16> to vector<32x256xbf16>
    %16 = vector.broadcast %10 : vector<1x256xbf16> to vector<32x256xbf16>
    %17 = arith.mulf %15, %16 : vector<32x256xbf16>
    %c0_3 = arith.constant 0 : index
    %c0_4 = arith.constant 0 : index
    %18 = vector.load %arg3[%c0_3, %c0_4] : memref<32x1xbf16, #tpu.memory_space<vmem>>, vector<32x1xbf16>
    %19 = vector.broadcast %18 : vector<32x1xbf16> to vector<32x256xbf16>
    %20 = vector.broadcast %11 : vector<1x256xbf16> to vector<32x256xbf16>
    %21 = arith.mulf %19, %20 : vector<32x256xbf16>
    %22 = arith.addf %17, %21 : vector<32x256xbf16>
    %c0_5 = arith.constant 0 : index
    %c0_6 = arith.constant 0 : index
    %23 = vector.load %arg4[%c0_5, %c0_6] : memref<32x1xbf16, #tpu.memory_space<vmem>>, vector<32x1xbf16>
    %24 = vector.broadcast %23 : vector<32x1xbf16> to vector<32x256xbf16>
    %25 = vector.broadcast %12 : vector<1x256xbf16> to vector<32x256xbf16>
    %26 = arith.mulf %24, %25 : vector<32x256xbf16>
    %27 = arith.addf %22, %26 : vector<32x256xbf16>
    %c0_7 = arith.constant 0 : index
    %c0_8 = arith.constant 0 : index
    %28 = vector.load %arg5[%c0_7, %c0_8] : memref<32x1xbf16, #tpu.memory_space<vmem>>, vector<32x1xbf16>
    %29 = vector.broadcast %28 : vector<32x1xbf16> to vector<32x256xbf16>
    %30 = vector.broadcast %13 : vector<1x256xbf16> to vector<32x256xbf16>
    %31 = arith.mulf %29, %30 : vector<32x256xbf16>
    %32 = arith.addf %27, %31 : vector<32x256xbf16>
    %c0_9 = arith.constant 0 : index
    %c0_10 = arith.constant 0 : index
    %33 = vector.load %arg6[%c0_9, %c0_10] : memref<32x1xbf16, #tpu.memory_space<vmem>>, vector<32x1xbf16>
    %34 = vector.broadcast %33 : vector<32x1xbf16> to vector<32x256xbf16>
    %35 = arith.addf %32, %34 : vector<32x256xbf16>
    %cst_11 = arith.constant 2.001950e-01 : bf16
    %36 = vector.broadcast %cst_11 : bf16 to vector<32x256xbf16>
    %37 = arith.mulf %35, %36 : vector<32x256xbf16>
    %38 = arith.maximumf %35, %37 : vector<32x256xbf16>
    %c0_12 = arith.constant 0 : index
    %c0_13 = arith.constant 0 : index
    %39 = vector.load %arg7[%c0_12, %c0_13] : memref<32x32xbf16, #tpu.memory_space<vmem>>, vector<32x32xbf16>
    %cst_14 = arith.constant dense<0.000000e+00> : vector<32x256xf32>
    %40 = tpu.matmul %39, %38, %cst_14 {dimension_numbers = #tpu.dot_dimension_numbers<[1], [0], [0], [1], [0, 0, 1, 1], [], []>} : vector<32x32xbf16>, vector<32x256xbf16>, vector<32x256xf32> -> vector<32x256xf32>
    %c0_15 = arith.constant 0 : index
    %c0_16 = arith.constant 0 : index
    %41 = vector.load %arg8[%c0_15, %c0_16] : memref<32x1xf32, #tpu.memory_space<vmem>>, vector<32x1xf32>
    %42 = vector.broadcast %41 : vector<32x1xf32> to vector<32x256xf32>
    %43 = arith.addf %40, %42 : vector<32x256xf32>
    %44 = arith.truncf %43 : vector<32x256xf32> to vector<32x256xbf16>
    %cst_17 = arith.constant 2.001950e-01 : bf16
    %45 = vector.broadcast %cst_17 : bf16 to vector<32x256xbf16>
    %46 = arith.mulf %44, %45 : vector<32x256xbf16>
    %47 = arith.maximumf %44, %46 : vector<32x256xbf16>
    %c0_18 = arith.constant 0 : index
    %c0_19 = arith.constant 0 : index
    %48 = vector.load %arg9[%c0_18, %c0_19] : memref<1x32xbf16, #tpu.memory_space<vmem>>, vector<1x32xbf16>
    %cst_20 = arith.constant dense<0.000000e+00> : vector<1x256xf32>
    %49 = tpu.matmul %48, %47, %cst_20 {dimension_numbers = #tpu.dot_dimension_numbers<[1], [0], [0], [1], [0, 0, 1, 1], [], []>} : vector<1x32xbf16>, vector<32x256xbf16>, vector<1x256xf32> -> vector<1x256xf32>
    %c0_21 = arith.constant 0 : index
    %c0_22 = arith.constant 0 : index
    %50 = vector.load %arg10[%c0_21, %c0_22] : memref<1x1xf32, #tpu.memory_space<vmem>>, vector<1x1xf32>
    %51 = vector.broadcast %50 : vector<1x1xf32> to vector<1x256xf32>
    %52 = arith.addf %49, %51 : vector<1x256xf32>
    %53 = arith.negf %52 : vector<1x256xf32>
    %54 = math.exp %53 : vector<1x256xf32>
    %cst_23 = arith.constant 1.000000e+00 : f32
    %55 = vector.broadcast %cst_23 : f32 to vector<1x256xf32>
    %56 = arith.addf %55, %54 : vector<1x256xf32>
    %57 = arith.divf %55, %56 : vector<1x256xf32>
    %c0_24 = arith.constant 0 : index
    %c0_25 = arith.constant 0 : index
    %58 = vector.load %arg11[%c0_24, %c0_25] : memref<1x256xf32, #tpu.memory_space<vmem>>, vector<1x256xf32>
    tpu.vector_store %arg11[%c0_24, %c0_25], %57 {strides = array<i32>} : memref<1x256xf32, #tpu.memory_space<vmem>>, vector<1x256xf32>,
    return
  }
  func.func @transform_0(%arg0: i32) -> (i32, i32) {
    %c0_i32 = arith.constant 0 : i32
    %c0_i32_0 = arith.constant 0 : i32
    return %c0_i32, %arg0 : i32, i32
  }
  func.func @transform_1(%arg0: i32) -> (i32, i32) {
    %c0_i32 = arith.constant 0 : i32
    %c0_i32_0 = arith.constant 0 : i32
    %c0_i32_1 = arith.constant 0 : i32
    return %c0_i32, %c0_i32_0 : i32, i32
  }
  func.func @transform_2(%arg0: i32) -> (i32, i32) {
    %c0_i32 = arith.constant 0 : i32
    %c0_i32_0 = arith.constant 0 : i32
    %c0_i32_1 = arith.constant 0 : i32
    return %c0_i32, %c0_i32_0 : i32, i32
  }
  func.func @transform_3(%arg0: i32) -> (i32, i32) {
    %c0_i32 = arith.constant 0 : i32
    %c0_i32_0 = arith.constant 0 : i32
    %c0_i32_1 = arith.constant 0 : i32
    return %c0_i32, %c0_i32_0 : i32, i32
  }
  func.func @transform_4(%arg0: i32) -> (i32, i32) {
    %c0_i32 = arith.constant 0 : i32
    %c0_i32_0 = arith.constant 0 : i32
    %c0_i32_1 = arith.constant 0 : i32
    return %c0_i32, %c0_i32_0 : i32, i32
  }
  func.func @transform_5(%arg0: i32) -> (i32, i32) {
    %c0_i32 = arith.constant 0 : i32
    %c0_i32_0 = arith.constant 0 : i32
    %c0_i32_1 = arith.constant 0 : i32
    return %c0_i32, %c0_i32_0 : i32, i32
  }
  func.func @transform_6(%arg0: i32) -> (i32, i32) {
    %c0_i32 = arith.constant 0 : i32
    %c0_i32_0 = arith.constant 0 : i32
    %c0_i32_1 = arith.constant 0 : i32
    return %c0_i32, %c0_i32_0 : i32, i32
  }
  func.func @transform_7(%arg0: i32) -> (i32, i32) {
    %c0_i32 = arith.constant 0 : i32
    %c0_i32_0 = arith.constant 0 : i32
    %c0_i32_1 = arith.constant 0 : i32
    return %c0_i32, %c0_i32_0 : i32, i32
  }
  func.func @transform_8(%arg0: i32) -> (i32, i32) {
    %c0_i32 = arith.constant 0 : i32
    %c0_i32_0 = arith.constant 0 : i32
    %c0_i32_1 = arith.constant 0 : i32
    return %c0_i32, %c0_i32_0 : i32, i32
  }
  func.func @transform_9(%arg0: i32) -> (i32, i32) {
    %c0_i32 = arith.constant 0 : i32
    %c0_i32_0 = arith.constant 0 : i32
    %c0_i32_1 = arith.constant 0 : i32
    return %c0_i32, %c0_i32_0 : i32, i32
  }
  func.func @transform_10(%arg0: i32) -> (i32, i32) {
    %c0_i32 = arith.constant 0 : i32
    %c0_i32_0 = arith.constant 0 : i32
    return %c0_i32, %arg0 : i32, i32
  }
}

</mosaic_0001>

<llo_original>
// kernel: _dist2logit_impl.1
$region0: #{_dist2logit_impl.1}
  #allocation0 [shape = 'u32[]', space=smem, size = 0x4, offset = 0x4, fixed_abs, tag = 'smem constant byte address 0x4 - core index']
  #allocation1 [shape = 'u32[144,128]{1,0:T(1,128)}', space=vmem, size = 0x12000, scoped, tag = 'internal scratch']
  #allocation2 [shape = 'f32[1,1]{1,0:T(1,128)S(1)}', space=vmem, size = 0x200, scoped, tag = 'scoped memory for _dist2logit_impl.1']
  %s0 = inlined_call_operand.hbm [shape: f32[2,512], index: 0, kind: input, shape index: {}]
  %s1 = inlined_call_operand.hbm [shape: bf16[32,1], index: 1, kind: input, shape index: {}]
  %s2 = inlined_call_operand.hbm [shape: bf16[32,1], index: 2, kind: input, shape index: {}]
  %s3 = inlined_call_operand.hbm [shape: bf16[32,1], index: 3, kind: input, shape index: {}]
  %s4 = inlined_call_operand.hbm [shape: bf16[32,1], index: 4, kind: input, shape index: {}]
  %s5 = inlined_call_operand.hbm [shape: bf16[32,1], index: 5, kind: input, shape index: {}]
  %s6 = inlined_call_operand.hbm [shape: bf16[32,32], index: 6, kind: input, shape index: {}]
  %s7 = inlined_call_operand.hbm [shape: f32[32,1], index: 7, kind: input, shape index: {}]
  %s8 = inlined_call_operand.hbm [shape: bf16[1,32], index: 8, kind: input, shape index: {}]
  %s9 = inlined_call_operand.<no memory space> [shape: f32[1,1], index: 9, kind: input, shape index: {}]
  %s10 = inlined_call_operand.hbm [shape: f32[1,512], index: 10, kind: output, shape index: {}]
  %s11 = sld [smem:[#allocation0]]
  $region109: #{_dist2logit_impl.1} parent=0
    _
  %s13 = ssub.s32 1, %s11
  %s14 = scalar_select 0, %s13, %s11
  %v15 = vstv %s9
  %16 = vst [vmem:[#allocation2] sm:$0x1] %v15
  $region1: #{_dist2logit_impl.1} parent=0
    #allocation3 [shape = 'u8[4096]{0}', space=vmem, size = 0x1000, scoped, tag = 'input window, operand 0']
    #allocation4 [shape = 's32[2]{0}', space=sflag, size = 0x8, scoped, tag = 'scoped memory for _dist2logit_impl.1']
    #allocation5 [shape = 's32[2]{0}', space=sflag, size = 0x8, scoped, tag = 'scoped memory for _dist2logit_impl.1']
    #allocation6 [shape = 'u8[8192]{0}', space=vmem, size = 0x2000, scoped, tag = 'input window, operand 1, single buffered']
    #allocation7 [shape = 's32[1]{0}', space=sflag, size = 0x4, scoped, tag = 'scoped memory for _dist2logit_impl.1']
    #allocation8 [shape = 'u8[8192]{0}', space=vmem, size = 0x2000, scoped, tag = 'input window, operand 2, single buffered']
    #allocation9 [shape = 'u8[8192]{0}', space=vmem, size = 0x2000, scoped, tag = 'input window, operand 3, single buffered']
    #allocation10 [shape = 's32[1]{0}', space=sflag, size = 0x4, scoped, tag = 'scoped memory for _dist2logit_impl.1']
    #allocation11 [shape = 'u8[8192]{0}', space=vmem, size = 0x2000, scoped, tag = 'input window, operand 4, single buffered']
    #allocation12 [shape = 'u8[8192]{0}', space=vmem, size = 0x2000, scoped, tag = 'input window, operand 5, single buffered']
    #allocation13 [shape = 's32[1]{0}', space=sflag, size = 0x4, scoped, tag = 'scoped memory for _dist2logit_impl.1']
    #allocation14 [shape = 'u8[8192]{0}', space=vmem, size = 0x2000, scoped, tag = 'input window, operand 6, single buffered']
    #allocation15 [shape = 'u8[16384]{0}', space=vmem, size = 0x4000, scoped, tag = 'input window, operand 7, single buffered']
    #allocation16 [shape = 's32[1]{0}', space=sflag, size = 0x4, scoped, tag = 'scoped memory for _dist2logit_impl.1']
    #allocation17 [shape = 'u8[512]{0}', space=vmem, size = 0x400, scoped, tag = 'input window, operand 8, single buffered']
    #allocation18 [shape = 'u8[2048]{0}', space=vmem, size = 0x800, scoped, tag = 'output window, operand 0']
    %17 = vsyncpa [#allocation4], 0
    %s18 = scalar_lea.sflag [#allocation4], 1
    %19 = vsyncpa %s18, 0
    %20 = vsyncpa [#allocation7], 0
    %21 = vsyncpa [#allocation10], 0
    %22 = vsyncpa [#allocation13], 0
    %23 = vsyncpa [#allocation16], 0
    %24 = vsyncpa [#allocation5], 0
    %s25 = scalar_lea.sflag [#allocation5], 1
    %26 = vsyncpa %s25, 0
    loop: start=0, step=1, limit=4
    $region2: #{_dist2logit_impl.1} parent=1 // loop_pre_header
      _
    $region3: #{_dist2logit_impl.1} parent=1 // loop_header
      %s28 = sphi 0, %s32
      %p29 = scmp.ge.s32.totalorder %s28, 4
      %s38 = sphi 0, %s40
      %s41 = sphi 0, %s38
      %s42 = sphi 0, %s41
      %s58 = sphi 0, %s42
      %s62 = sphi 0, %s62
      %s64 = sphi 0, %s62
      %s65 = sphi 0, %s64
      %s79 = sphi 0, %s65
      %s83 = sphi 0, %s83
      %s85 = sphi 0, %s83
      %s86 = sphi 0, %s85
      %s100 = sphi 0, %s86
      %s104 = sphi 0, %s104
      %s106 = sphi 0, %s104
      %s107 = sphi 0, %s106
      %s121 = sphi 0, %s107
      %s125 = sphi 0, %s125
      %s127 = sphi 0, %s125
      %s128 = sphi 0, %s127
      %s142 = sphi 0, %s128
      %s146 = sphi 0, %s146
      %s148 = sphi 0, %s146
      %s149 = sphi 0, %s148
      %s163 = sphi 0, %s149
      %s167 = sphi 0, %s167
      %s169 = sphi 0, %s167
      %s170 = sphi 0, %s169
      %s184 = sphi 0, %s170
      %s188 = sphi 0, %s188
      %s190 = sphi 0, %s188
      %s191 = sphi 0, %s190
      %s205 = sphi 0, %s191
      %s209 = sphi 0, %s209
      %s211 = sphi 0, %s209
      %s212 = sphi 0, %s211
      %s226 = sphi 0, %s212
      %s230 = sphi 0, %s230
      %s232 = sphi 0, %s230
      %s233 = sphi 0, %s232
      %s247 = sphi 0, %s233
      %s253 = sphi 0, %s255
      %s256 = sphi 0, %s253
      %s257 = sphi 0, %s256
      %s273 = sphi 0, %s257
    $region4: #{_dist2logit_impl.1} parent=1 // loop_header_branch
      %31 = sbr.rel (%p29) target = $region8
    $region5: #{_dist2logit_impl.1} parent=1 // loop_body
      %s33 = ssub.s32 %s28, 1
      %s34 = ssub.s32 %s28, 2
      %s35 = sadd.s32 %s28, 1
      %s36 = ssub.s32 %s28, %s35
      %p37 = scmp.eq.s32.totalorder %s36, 0
      %s39 = sadd.s32 %s38, 1
      %s40 = scalar_select %p37, %s38, %s39
      %p43 = pneg %p37
      %p44 = scmp.eq.s32.totalorder %s28, 1
      %p45 = por %p43, %p44
      %p46 = scmp.ne.s32.totalorder %s38, %s41
      %p47 = scmp.eq.s32.totalorder %s28, 0
      %p48 = por %p46, %p47
      %p49 = scmp.ne.s32.totalorder %s38, %s41
      %p50 = scmp.eq.s32.totalorder %s33, 1
      %p51 = por %p49, %p50
      %p52 = scmp.ne.s32.totalorder %s41, %s42
      %p53 = scmp.eq.s32.totalorder %s33, 0
      %p54 = por %p52, %p53
      %p55 = scmp.ne.s32.totalorder %s41, %s42
      %p56 = scmp.eq.s32.totalorder %s34, 1
      %p57 = por %p55, %p56
      %p59 = scmp.ne.s32.totalorder %s42, %s58
      %p60 = scmp.eq.s32.totalorder %s34, 0
      %p61 = por %p59, %p60
      %s63 = sadd.s32 %s62, 1
      %p66 = scmp.eq.s32.totalorder %s28, 1
      %p67 = scmp.ne.s32.totalorder %s62, %s64
      %p68 = scmp.eq.s32.totalorder %s28, 0
      %p69 = por %p67, %p68
      %p70 = scmp.ne.s32.totalorder %s62, %s64
      %p71 = scmp.eq.s32.totalorder %s33, 1
      %p72 = por %p70, %p71
      %p73 = scmp.ne.s32.totalorder %s64, %s65
      %p74 = scmp.eq.s32.totalorder %s33, 0
      %p75 = por %p73, %p74
      %p76 = scmp.ne.s32.totalorder %s64, %s65
      %p77 = scmp.eq.s32.totalorder %s34, 1
      %p78 = por %p76, %p77
      %p80 = scmp.ne.s32.totalorder %s65, %s79
      %p81 = scmp.eq.s32.totalorder %s34, 0
      %p82 = por %p80, %p81
      %s84 = sadd.s32 %s83, 1
      %p87 = scmp.eq.s32.totalorder %s28, 1
      %p88 = scmp.ne.s32.totalorder %s83, %s85
      %p89 = scmp.eq.s32.totalorder %s28, 0
      %p90 = por %p88, %p89
      %p91 = scmp.ne.s32.totalorder %s83, %s85
      %p92 = scmp.eq.s32.totalorder %s33, 1
      %p93 = por %p91, %p92
      %p94 = scmp.ne.s32.totalorder %s85, %s86
      %p95 = scmp.eq.s32.totalorder %s33, 0
      %p96 = por %p94, %p95
      %p97 = scmp.ne.s32.totalorder %s85, %s86
      %p98 = scmp.eq.s32.totalorder %s34, 1
      %p99 = por %p97, %p98
      %p101 = scmp.ne.s32.totalorder %s86, %s100
      %p102 = scmp.eq.s32.totalorder %s34, 0
      %p103 = por %p101, %p102
      %s105 = sadd.s32 %s104, 1
      %p108 = scmp.eq.s32.totalorder %s28, 1
      %p109 = scmp.ne.s32.totalorder %s104, %s106
      %p110 = scmp.eq.s32.totalorder %s28, 0
      %p111 = por %p109, %p110
      %p112 = scmp.ne.s32.totalorder %s104, %s106
      %p113 = scmp.eq.s32.totalorder %s33, 1
      %p114 = por %p112, %p113
      %p115 = scmp.ne.s32.totalorder %s106, %s107
      %p116 = scmp.eq.s32.totalorder %s33, 0
      %p117 = por %p115, %p116
      %p118 = scmp.ne.s32.totalorder %s106, %s107
      %p119 = scmp.eq.s32.totalorder %s34, 1
      %p120 = por %p118, %p119
      %p122 = scmp.ne.s32.totalorder %s107, %s121
      %p123 = scmp.eq.s32.totalorder %s34, 0
      %p124 = por %p122, %p123
      %s126 = sadd.s32 %s125, 1
      %p129 = scmp.eq.s32.totalorder %s28, 1
      %p130 = scmp.ne.s32.totalorder %s125, %s127
      %p131 = scmp.eq.s32.totalorder %s28, 0
      %p132 = por %p130, %p131
      %p133 = scmp.ne.s32.totalorder %s125, %s127
      %p134 = scmp.eq.s32.totalorder %s33, 1
      %p135 = por %p133, %p134
      %p136 = scmp.ne.s32.totalorder %s127, %s128
      %p137 = scmp.eq.s32.totalorder %s33, 0
      %p138 = por %p136, %p137
      %p139 = scmp.ne.s32.totalorder %s127, %s128
      %p140 = scmp.eq.s32.totalorder %s34, 1
      %p141 = por %p139, %p140
      %p143 = scmp.ne.s32.totalorder %s128, %s142
      %p144 = scmp.eq.s32.totalorder %s34, 0
      %p145 = por %p143, %p144
      %s147 = sadd.s32 %s146, 1
      %p150 = scmp.eq.s32.totalorder %s28, 1
      %p151 = scmp.ne.s32.totalorder %s146, %s148
      %p152 = scmp.eq.s32.totalorder %s28, 0
      %p153 = por %p151, %p152
      %p154 = scmp.ne.s32.totalorder %s146, %s148
      %p155 = scmp.eq.s32.totalorder %s33, 1
      %p156 = por %p154, %p155
      %p157 = scmp.ne.s32.totalorder %s148, %s149
      %p158 = scmp.eq.s32.totalorder %s33, 0
      %p159 = por %p157, %p158
      %p160 = scmp.ne.s32.totalorder %s148, %s149
      %p161 = scmp.eq.s32.totalorder %s34, 1
      %p162 = por %p160, %p161
      %p164 = scmp.ne.s32.totalorder %s149, %s163
      %p165 = scmp.eq.s32.totalorder %s34, 0
      %p166 = por %p164, %p165
      %s168 = sadd.s32 %s167, 1
      %p171 = scmp.eq.s32.totalorder %s28, 1
      %p172 = scmp.ne.s32.totalorder %s167, %s169
      %p173 = scmp.eq.s32.totalorder %s28, 0
      %p174 = por %p172, %p173
      %p175 = scmp.ne.s32.totalorder %s167, %s169
      %p176 = scmp.eq.s32.totalorder %s33, 1
      %p177 = por %p175, %p176
      %p178 = scmp.ne.s32.totalorder %s169, %s170
      %p179 = scmp.eq.s32.totalorder %s33, 0
      %p180 = por %p178, %p179
      %p181 = scmp.ne.s32.totalorder %s169, %s170
      %p182 = scmp.eq.s32.totalorder %s34, 1
      %p183 = por %p181, %p182
      %p185 = scmp.ne.s32.totalorder %s170, %s184
      %p186 = scmp.eq.s32.totalorder %s34, 0
      %p187 = por %p185, %p186
      %s189 = sadd.s32 %s188, 1
      %p192 = scmp.eq.s32.totalorder %s28, 1
      %p193 = scmp.ne.s32.totalorder %s188, %s190
      %p194 = scmp.eq.s32.totalorder %s28, 0
      %p195 = por %p193, %p194
      %p196 = scmp.ne.s32.totalorder %s188, %s190
      %p197 = scmp.eq.s32.totalorder %s33, 1
      %p198 = por %p196, %p197
      %p199 = scmp.ne.s32.totalorder %s190, %s191
      %p200 = scmp.eq.s32.totalorder %s33, 0
      %p201 = por %p199, %p200
      %p202 = scmp.ne.s32.totalorder %s190, %s191
      %p203 = scmp.eq.s32.totalorder %s34, 1
      %p204 = por %p202, %p203
      %p206 = scmp.ne.s32.totalorder %s191, %s205
      %p207 = scmp.eq.s32.totalorder %s34, 0
      %p208 = por %p206, %p207
      %s210 = sadd.s32 %s209, 1
      %p213 = scmp.eq.s32.totalorder %s28, 1
      %p214 = scmp.ne.s32.totalorder %s209, %s211
      %p215 = scmp.eq.s32.totalorder %s28, 0
      %p216 = por %p214, %p215
      %p217 = scmp.ne.s32.totalorder %s209, %s211
      %p218 = scmp.eq.s32.totalorder %s33, 1
      %p219 = por %p217, %p218
      %p220 = scmp.ne.s32.totalorder %s211, %s212
      %p221 = scmp.eq.s32.totalorder %s33, 0
      %p222 = por %p220, %p221
      %p223 = scmp.ne.s32.totalorder %s211, %s212
      %p224 = scmp.eq.s32.totalorder %s34, 1
      %p225 = por %p223, %p224
      %p227 = scmp.ne.s32.totalorder %s212, %s226
      %p228 = scmp.eq.s32.totalorder %s34, 0
      %p229 = por %p227, %p228
      %s231 = sadd.s32 %s230, 1
      %p234 = scmp.eq.s32.totalorder %s28, 1
      %p235 = scmp.ne.s32.totalorder %s230, %s232
      %p236 = scmp.eq.s32.totalorder %s28, 0
      %p237 = por %p235, %p236
      %p238 = scmp.ne.s32.totalorder %s230, %s232
      %p239 = scmp.eq.s32.totalorder %s33, 1
      %p240 = por %p238, %p239
      %p241 = scmp.ne.s32.totalorder %s232, %s233
      %p242 = scmp.eq.s32.totalorder %s33, 0
      %p243 = por %p241, %p242
      %p244 = scmp.ne.s32.totalorder %s232, %s233
      %p245 = scmp.eq.s32.totalorder %s34, 1
      %p246 = por %p244, %p245
      %p248 = scmp.ne.s32.totalorder %s233, %s247
      %p249 = scmp.eq.s32.totalorder %s34, 0
      %p250 = por %p248, %p249
      %s251 = ssub.s32 %s28, %s35
      %p252 = scmp.eq.s32.totalorder %s251, 0
      %s254 = sadd.s32 %s253, 1
      %s255 = scalar_select %p252, %s253, %s254
      %p258 = pneg %p252
      %p259 = scmp.eq.s32.totalorder %s28, 1
      %p260 = por %p258, %p259
      %p261 = scmp.ne.s32.totalorder %s253, %s256
      %p262 = scmp.eq.s32.totalorder %s28, 0
      %p263 = por %p261, %p262
      %p264 = scmp.ne.s32.totalorder %s253, %s256
      %p265 = scmp.eq.s32.totalorder %s33, 1
      %p266 = por %p264, %p265
      %p267 = scmp.ne.s32.totalorder %s256, %s257
      %p268 = scmp.eq.s32.totalorder %s33, 0
      %p269 = por %p267, %p268
      %p270 = scmp.ne.s32.totalorder %s256, %s257
      %p271 = scmp.eq.s32.totalorder %s34, 1
      %p272 = por %p270, %p271
      %p274 = scmp.ne.s32.totalorder %s257, %s273
      %p275 = scmp.eq.s32.totalorder %s34, 0
      %p276 = por %p274, %p275
      %p277 = scmp.le.s32.totalorder 1, %s28
      %p278 = scmp.lt.s32.totalorder %s28, 3
      %p279 = pnand %p277, %p278
      %p280 = pneg %p279
      // Predicated region
      $region9: #{_dist2logit_impl.1} parent=5 // pred_check
        _
      $region10: #{_dist2logit_impl.1} parent=5 // pred_check_branch
        %282 = sbr.rel (%p279) target = $region12
      $region11: #{_dist2logit_impl.1} parent=5 // pred_region
        %s283 = ssub.s32 %s28, 1
        // Predicated region
        $region13: #{_dist2logit_impl.1} parent=11 // pred_check
          %p284 = pneg %p75
        $region14: #{_dist2logit_impl.1} parent=11 // pred_check_branch
          %286 = sbr.rel (%p284) target = $region16
        $region15: #{_dist2logit_impl.1} parent=11 // pred_region
          %s288 = ssub.s32 256, 256
          %289 = vsyncadd [#allocation7], %s288
          %s290 = sshll.u32 [#allocation6], 4
          %s291 = int_to_ptr.vmem [resolvable:$true] %s290
          %296 = dma.hbm_to_vmem [thread:$0]  %s1, 256, %s291, [#allocation7], 64, 64, 4
        $region16: #{_dist2logit_impl.1} parent=11 // pred_fallthru
          _
        // Predicated region
        $region17: #{_dist2logit_impl.1} parent=11 // pred_check
          %p297 = pneg %p96
        $region18: #{_dist2logit_impl.1} parent=11 // pred_check_branch
          %299 = sbr.rel (%p297) target = $region20
        $region19: #{_dist2logit_impl.1} parent=11 // pred_region
          %s301 = ssub.s32 256, 256
          %302 = vsyncadd [#allocation7], %s301
          %s303 = sshll.u32 [#allocation8], 4
          %s304 = int_to_ptr.vmem [resolvable:$true] %s303
          %309 = dma.hbm_to_vmem [thread:$0]  %s2, 256, %s304, [#allocation7], 64, 64, 4
        $region20: #{_dist2logit_impl.1} parent=11 // pred_fallthru
          _
        // Predicated region
        $region21: #{_dist2logit_impl.1} parent=11 // pred_check
          %p310 = pneg %p117
        $region22: #{_dist2logit_impl.1} parent=11 // pred_check_branch
          %312 = sbr.rel (%p310) target = $region24
        $region23: #{_dist2logit_impl.1} parent=11 // pred_region
          %s314 = ssub.s32 256, 256
          %315 = vsyncadd [#allocation10], %s314
          %s316 = sshll.u32 [#allocation9], 4
          %s317 = int_to_ptr.vmem [resolvable:$true] %s316
          %322 = dma.hbm_to_vmem [thread:$0]  %s3, 256, %s317, [#allocation10], 64, 64, 4
        $region24: #{_dist2logit_impl.1} parent=11 // pred_fallthru
          _
        // Predicated region
        $region25: #{_dist2logit_impl.1} parent=11 // pred_check
          %p323 = pneg %p138
        $region26: #{_dist2logit_impl.1} parent=11 // pred_check_branch
          %325 = sbr.rel (%p323) target = $region28
        $region27: #{_dist2logit_impl.1} parent=11 // pred_region
          %s327 = ssub.s32 256, 256
          %328 = vsyncadd [#allocation10], %s327
          %s329 = sshll.u32 [#allocation11], 4
          %s330 = int_to_ptr.vmem [resolvable:$true] %s329
          %335 = dma.hbm_to_vmem [thread:$0]  %s4, 256, %s330, [#allocation10], 64, 64, 4
        $region28: #{_dist2logit_impl.1} parent=11 // pred_fallthru
          _
        // Predicated region
        $region29: #{_dist2logit_impl.1} parent=11 // pred_check
          %p336 = pneg %p159
        $region30: #{_dist2logit_impl.1} parent=11 // pred_check_branch
          %338 = sbr.rel (%p336) target = $region32
        $region31: #{_dist2logit_impl.1} parent=11 // pred_region
          %s340 = ssub.s32 256, 256
          %341 = vsyncadd [#allocation13], %s340
          %s342 = sshll.u32 [#allocation12], 4
          %s343 = int_to_ptr.vmem [resolvable:$true] %s342
          %348 = dma.hbm_to_vmem [thread:$0]  %s5, 256, %s343, [#allocation13], 64, 64, 4
        $region32: #{_dist2logit_impl.1} parent=11 // pred_fallthru
          _
        // Predicated region
        $region33: #{_dist2logit_impl.1} parent=11 // pred_check
          %p349 = pneg %p180
        $region34: #{_dist2logit_impl.1} parent=11 // pred_check_branch
          %351 = sbr.rel (%p349) target = $region36
        $region35: #{_dist2logit_impl.1} parent=11 // pred_region
          %s353 = ssub.s32 256, 256
          %354 = vsyncadd [#allocation13], %s353
          %s355 = sshll.u32 [#allocation14], 4
          %s356 = int_to_ptr.vmem [resolvable:$true] %s355
          %361 = dma.hbm_to_vmem [thread:$0]  %s6, 256, %s356, [#allocation13], 64, 64, 4
        $region36: #{_dist2logit_impl.1} parent=11 // pred_fallthru
          _
        // Predicated region
        $region37: #{_dist2logit_impl.1} parent=11 // pred_check
          %p362 = pneg %p201
        $region38: #{_dist2logit_impl.1} parent=11 // pred_check_branch
          %364 = sbr.rel (%p362) target = $region40
        $region39: #{_dist2logit_impl.1} parent=11 // pred_region
          %s366 = ssub.s32 512, 512
          %367 = vsyncadd [#allocation16], %s366
          %s368 = sshll.u32 [#allocation15], 4
          %s369 = int_to_ptr.vmem [resolvable:$true] %s368
          %374 = dma.hbm_to_vmem [thread:$0]  %s7, 512, %s369, [#allocation16], 128, 128, 8
        $region40: #{_dist2logit_impl.1} parent=11 // pred_fallthru
          _
        // Predicated region
        $region41: #{_dist2logit_impl.1} parent=11 // pred_check
          %p375 = pneg %p222
        $region42: #{_dist2logit_impl.1} parent=11 // pred_check_branch
          %377 = sbr.rel (%p375) target = $region44
        $region43: #{_dist2logit_impl.1} parent=11 // pred_region
          %s379 = ssub.s32 16, 16
          %380 = vsyncadd [#allocation16], %s379
          %s382 = sshll.u32 [#allocation17], 4
          %s383 = int_to_ptr.vmem [resolvable:$true] %s382
          %385 = dma.hbm_to_vmem [thread:$0]  %s8, 16, %s383, [#allocation16]
        $region44: #{_dist2logit_impl.1} parent=11 // pred_fallthru
          _
        // Predicated region
        $region45: #{_dist2logit_impl.1} parent=11 // pred_check
          %p386 = pneg %p243
        $region46: #{_dist2logit_impl.1} parent=11 // pred_check_branch
          %388 = sbr.rel (%p386) target = $region48
        $region47: #{_dist2logit_impl.1} parent=11 // pred_region
          _
        $region48: #{_dist2logit_impl.1} parent=11 // pred_fallthru
          _
      $region12: #{_dist2logit_impl.1} parent=5 // pred_fallthru
        _
      %p389 = scmp.lt.s32.totalorder %s28, 2
      // Predicated region
      $region49: #{_dist2logit_impl.1} parent=5 // pred_check
        %p390 = pneg %p389
      $region50: #{_dist2logit_impl.1} parent=5 // pred_check_branch
        %392 = sbr.rel (%p390) target = $region52
      $region51: #{_dist2logit_impl.1} parent=5 // pred_region
        // Predicated region
        $region53: #{_dist2logit_impl.1} parent=51 // pred_check
          %p393 = pneg %p48
        $region54: #{_dist2logit_impl.1} parent=51 // pred_check_branch
          %395 = sbr.rel (%p393) target = $region56
        $region55: #{_dist2logit_impl.1} parent=51 // pred_region
          %s396 = sand.u32 %s38, 1
          %s397 = scalar_lea.sflag [#allocation4], %s396
          %s398 = sand.u32 %s38, 1
          %s399 = smul.addr %s398, 4
          %s400 = scalar_lea.vmem [#allocation3], %s399
          %s401 = smul.u32 2, %s28
          %s403 = ssub.s32 64, 64
          %404 = vsyncadd %s397, %s403
          %s405 = smul.addr %s401, 32
          %s406 = scalar_lea.hbm %s0, %s405
          %s408 = sshll.u32 %s400, 4
          %s409 = int_to_ptr.vmem [resolvable:$true] %s408
          %411 = dma.hbm_to_vmem [thread:$0]  %s406, 64, %s409, %s397
        $region56: #{_dist2logit_impl.1} parent=51 // pred_fallthru
          _
      $region52: #{_dist2logit_impl.1} parent=5 // pred_fallthru
        _
      %p412 = scmp.le.s32.totalorder 1, %s28
      %p413 = scmp.lt.s32.totalorder %s28, 3
      %p414 = pnand %p412, %p413
      %p415 = pneg %p414
      // Predicated region
      $region57: #{_dist2logit_impl.1} parent=5 // pred_check
        _
      $region58: #{_dist2logit_impl.1} parent=5 // pred_check_branch
        %417 = sbr.rel (%p414) target = $region60
      $region59: #{_dist2logit_impl.1} parent=5 // pred_region
        %s418 = ssub.s32 %s28, 1
        %s419 = sand.u32 %s41, 1
        %s420 = scalar_lea.sflag [#allocation4], %s419
        %s421 = sand.u32 %s41, 1
        %s422 = smul.addr %s421, 4
        %s423 = scalar_lea.vmem [#allocation3], %s422
        // Predicated region
        $region61: #{_dist2logit_impl.1} parent=59 // pred_check
          %p424 = pneg %p54
        $region62: #{_dist2logit_impl.1} parent=59 // pred_check_branch
          %426 = sbr.rel (%p424) target = $region64
        $region63: #{_dist2logit_impl.1} parent=59 // pred_region
          %427 = dma.done %s420, 64
        $region64: #{_dist2logit_impl.1} parent=59 // pred_fallthru
          _
        // Predicated region
        $region65: #{_dist2logit_impl.1} parent=59 // pred_check
          %p428 = pneg %p75
        $region66: #{_dist2logit_impl.1} parent=59 // pred_check_branch
          %430 = sbr.rel (%p428) target = $region68
        $region67: #{_dist2logit_impl.1} parent=59 // pred_region
          %431 = dma.done [#allocation7], 256
        $region68: #{_dist2logit_impl.1} parent=59 // pred_fallthru
          _
        // Predicated region
        $region69: #{_dist2logit_impl.1} parent=59 // pred_check
          %p432 = pneg %p96
        $region70: #{_dist2logit_impl.1} parent=59 // pred_check_branch
          %434 = sbr.rel (%p432) target = $region72
        $region71: #{_dist2logit_impl.1} parent=59 // pred_region
          %435 = dma.done [#allocation7], 256
        $region72: #{_dist2logit_impl.1} parent=59 // pred_fallthru
          _
        // Predicated region
        $region73: #{_dist2logit_impl.1} parent=59 // pred_check
          %p436 = pneg %p117
        $region74: #{_dist2logit_impl.1} parent=59 // pred_check_branch
          %438 = sbr.rel (%p436) target = $region76
        $region75: #{_dist2logit_impl.1} parent=59 // pred_region
          %439 = dma.done [#allocation10], 256
        $region76: #{_dist2logit_impl.1} parent=59 // pred_fallthru
          _
        // Predicated region
        $region77: #{_dist2logit_impl.1} parent=59 // pred_check
          %p440 = pneg %p138
        $region78: #{_dist2logit_impl.1} parent=59 // pred_check_branch
          %442 = sbr.rel (%p440) target = $region80
        $region79: #{_dist2logit_impl.1} parent=59 // pred_region
          %443 = dma.done [#allocation10], 256
        $region80: #{_dist2logit_impl.1} parent=59 // pred_fallthru
          _
        // Predicated region
        $region81: #{_dist2logit_impl.1} parent=59 // pred_check
          %p444 = pneg %p159
        $region82: #{_dist2logit_impl.1} parent=59 // pred_check_branch
          %446 = sbr.rel (%p444) target = $region84
        $region83: #{_dist2logit_impl.1} parent=59 // pred_region
          %447 = dma.done [#allocation13], 256
        $region84: #{_dist2logit_impl.1} parent=59 // pred_fallthru
          _
        // Predicated region
        $region85: #{_dist2logit_impl.1} parent=59 // pred_check
          %p448 = pneg %p180
        $region86: #{_dist2logit_impl.1} parent=59 // pred_check_branch
          %450 = sbr.rel (%p448) target = $region88
        $region87: #{_dist2logit_impl.1} parent=59 // pred_region
          %451 = dma.done [#allocation13], 256
        $region88: #{_dist2logit_impl.1} parent=59 // pred_fallthru
          _
        // Predicated region
        $region89: #{_dist2logit_impl.1} parent=59 // pred_check
          %p452 = pneg %p201
        $region90: #{_dist2logit_impl.1} parent=59 // pred_check_branch
          %454 = sbr.rel (%p452) target = $region92
        $region91: #{_dist2logit_impl.1} parent=59 // pred_region
          %455 = dma.done [#allocation16], 512
        $region92: #{_dist2logit_impl.1} parent=59 // pred_fallthru
          _
        // Predicated region
        $region93: #{_dist2logit_impl.1} parent=59 // pred_check
          %p456 = pneg %p222
        $region94: #{_dist2logit_impl.1} parent=59 // pred_check_branch
          %458 = sbr.rel (%p456) target = $region96
        $region95: #{_dist2logit_impl.1} parent=59 // pred_region
          %459 = dma.done [#allocation16], 16
        $region96: #{_dist2logit_impl.1} parent=59 // pred_fallthru
          _
        %s460 = sand.u32 %s41, 1
        %s461 = scalar_lea.sflag [#allocation4], %s460
        %s462 = sand.u32 %s41, 1
        %s463 = smul.addr %s462, 4
        %s464 = scalar_lea.vmem [#allocation3], %s463
        %p465 = pneg %p54
        %p466 = pneg %p51
        %p467 = pneg %p75
        %p468 = pneg %p72
        %p469 = pneg %p96
        %p470 = pneg %p93
        %p471 = pneg %p117
        %p472 = pneg %p114
        %p473 = pneg %p138
        %p474 = pneg %p135
        %p475 = pneg %p159
        %p476 = pneg %p156
        %p477 = pneg %p180
        %p478 = pneg %p177
        %p479 = pneg %p201
        %p480 = pneg %p198
        %p481 = pneg %p222
        %p482 = pneg %p219
        %p483 = pneg %p243
        %p484 = pneg %p240
        %p485 = pneg %p269
        %p486 = pneg %p266
        %s487 = sand.u32 %s256, 1
        %s488 = scalar_lea.sflag [#allocation5], %s487
        %s489 = sand.u32 %s256, 1
        %s490 = smul.addr %s489, 2
        %s491 = scalar_lea.vmem [#allocation18], %s490
        %s492 = smul.u32 2, %s33
        %s493 = smul.u32 2, %s33
        %v496 = vld [vmem:[%s423] sm:$0xf]
        %v497 = vadd.f32 %v496, 0.1
        %v498 = vrcp.pop %v497
        %v500 = vrot.slane %v498, 7
        %v501 = vrot.slane %v500, 2
        %v503 = vmul.f32 %v496, %v501
        %v505 = vmul.f32 %v496, %v500
        %v507 = vlaneseq
        %v508 = vshrl.u32 %v507, 7
        %v509 = vsub.s32 0, %v508
        %v510 = vrot.slane %v496, %v509
        %v511 = vlaneseq
        %v512 = vshrl.u32 %v511, 7
        %v513 = vsub.s32 2, %v512
        %v514 = vrot.slane %v496, %v513
        %v517 = vpack.c.bf16 %v510, %v510
        %v518 = vpack.c.bf16 %v514, %v514
        %v519 = vlaneseq
        %v520 = vshrl.u32 %v519, 7
        %v521 = vsub.s32 1, %v520
        %v522 = vrot.slane %v496, %v521
        %v523 = vlaneseq
        %v524 = vshrl.u32 %v523, 7
        %v525 = vsub.s32 3, %v524
        %v526 = vrot.slane %v496, %v525
        %v529 = vpack.c.bf16 %v522, %v522
        %v530 = vpack.c.bf16 %v526, %v526
        %v532 = vlaneseq
        %v533 = vshrl.u32 %v532, 7
        %v534 = vsub.s32 0, %v533
        %v535 = vrot.slane %v503, %v534
        %v536 = vlaneseq
        %v537 = vshrl.u32 %v536, 7
        %v538 = vsub.s32 2, %v537
        %v539 = vrot.slane %v503, %v538
        %v542 = vpack.c.bf16 %v535, %v535
        %v543 = vpack.c.bf16 %v539, %v539
        %v545 = vlaneseq
        %v546 = vshrl.u32 %v545, 7
        %v547 = vsub.s32 1, %v546
        %v548 = vrot.slane %v505, %v547
        %v549 = vlaneseq
        %v550 = vshrl.u32 %v549, 7
        %v551 = vsub.s32 3, %v550
        %v552 = vrot.slane %v505, %v551
        %v555 = vpack.c.bf16 %v548, %v548
        %v556 = vpack.c.bf16 %v552, %v552
        %v557 = vld [vmem:[#allocation6] sm:$0xf]
        %v558 = vld [vmem:[#allocation6 + $0x4] sm:$0xf]
        %v559 = vld [vmem:[#allocation6 + $0x8] sm:$0xf]
        %v560 = vld [vmem:[#allocation6 + $0xc] sm:$0xf]
        %562 = vset.pattern.permute.xlu0 0
        %563 = vperm.xlu0 %562, %v557
        %v564 = vpop.permute.xlu0 %563
        %v567 = vunpack.c.l.s4 839922192
        %v568 = vunpack.c.0.s8 %v567
        %v569 = vlaneseq
        %v570 = vshrl.u32 %v569, 7
        %v571 = vsub.s32 %v568, %v570
        %v572 = vrot.slane %v564, %v571
        %574 = vset.pattern.permute.xlu0 0
        %575 = vperm.xlu0 %574, %v558
        %v576 = vpop.permute.xlu0 %575
        %v579 = vunpack.c.l.s4 839922192
        %v580 = vunpack.c.0.s8 %v579
        %v581 = vlaneseq
        %v582 = vshrl.u32 %v581, 7
        %v583 = vsub.s32 %v580, %v582
        %v584 = vrot.slane %v576, %v583
        %586 = vset.pattern.permute.xlu0 0
        %587 = vperm.xlu0 %586, %v559
        %v588 = vpop.permute.xlu0 %587
        %v591 = vunpack.c.l.s4 839922192
        %v592 = vunpack.c.0.s8 %v591
        %v593 = vlaneseq
        %v594 = vshrl.u32 %v593, 7
        %v595 = vsub.s32 %v592, %v594
        %v596 = vrot.slane %v588, %v595
        %598 = vset.pattern.permute.xlu0 0
        %599 = vperm.xlu0 %598, %v560
        %v600 = vpop.permute.xlu0 %599
        %v603 = vunpack.c.l.s4 839922192
        %v604 = vunpack.c.0.s8 %v603
        %v605 = vlaneseq
        %v606 = vshrl.u32 %v605, 7
        %v607 = vsub.s32 %v604, %v606
        %v608 = vrot.slane %v600, %v607
        %v610 = vpack.i.b16 %v517, %v517
        %v612 = vlaneseq
        %v613 = vshrl.u32 %v612, 7
        %v614 = vsub.s32 0, %v613
        %v615 = vrot.slane %v610, %v614
        %v617 = vpack.i.b16 %v518, %v518
        %v619 = vlaneseq
        %v620 = vshrl.u32 %v619, 7
        %v621 = vsub.s32 0, %v620
        %v622 = vrot.slane %v617, %v621
        %v625 = vunpack.c.l.b16 %v615
        %v626 = vunpack.c.l.b16 %v622
        %v627 = vpack.c.b16 %v626, %v625
        %v629 = vmul.bf16 %v572, %v627
        %v630 = vmul.bf16 %v584, %v627
        %v631 = vmul.bf16 %v596, %v627
        %v632 = vmul.bf16 %v608, %v627
        %v633 = vld [vmem:[#allocation8] sm:$0xf]
        %v634 = vld [vmem:[#allocation8 + $0x4] sm:$0xf]
        %v635 = vld [vmem:[#allocation8 + $0x8] sm:$0xf]
        %v636 = vld [vmem:[#allocation8 + $0xc] sm:$0xf]
        %638 = vset.pattern.permute.xlu0 0
        %639 = vperm.xlu0 %638, %v633
        %v640 = vpop.permute.xlu0 %639
        %v643 = vunpack.c.l.s4 839922192
        %v644 = vunpack.c.0.s8 %v643
        %v645 = vlaneseq
        %v646 = vshrl.u32 %v645, 7
        %v647 = vsub.s32 %v644, %v646
        %v648 = vrot.slane %v640, %v647
        %650 = vset.pattern.permute.xlu0 0
        %651 = vperm.xlu0 %650, %v634
        %v652 = vpop.permute.xlu0 %651
        %v655 = vunpack.c.l.s4 839922192
        %v656 = vunpack.c.0.s8 %v655
        %v657 = vlaneseq
        %v658 = vshrl.u32 %v657, 7
        %v659 = vsub.s32 %v656, %v658
        %v660 = vrot.slane %v652, %v659
        %662 = vset.pattern.permute.xlu0 0
        %663 = vperm.xlu0 %662, %v635
        %v664 = vpop.permute.xlu0 %663
        %v667 = vunpack.c.l.s4 839922192
        %v668 = vunpack.c.0.s8 %v667
        %v669 = vlaneseq
        %v670 = vshrl.u32 %v669, 7
        %v671 = vsub.s32 %v668, %v670
        %v672 = vrot.slane %v664, %v671
        %674 = vset.pattern.permute.xlu0 0
        %675 = vperm.xlu0 %674, %v636
        %v676 = vpop.permute.xlu0 %675
        %v679 = vunpack.c.l.s4 839922192
        %v680 = vunpack.c.0.s8 %v679
        %v681 = vlaneseq
        %v682 = vshrl.u32 %v681, 7
        %v683 = vsub.s32 %v680, %v682
        %v684 = vrot.slane %v676, %v683
        %v686 = vshrl.u32 %v529, 16
        %v687 = vpack.i.b16 %v686, %v686
        %v689 = vlaneseq
        %v690 = vshrl.u32 %v689, 7
        %v691 = vsub.s32 0, %v690
        %v692 = vrot.slane %v687, %v691
        %v694 = vshrl.u32 %v530, 16
        %v695 = vpack.i.b16 %v694, %v694
        %v697 = vlaneseq
        %v698 = vshrl.u32 %v697, 7
        %v699 = vsub.s32 0, %v698
        %v700 = vrot.slane %v695, %v699
        %v703 = vunpack.c.l.b16 %v692
        %v704 = vunpack.c.l.b16 %v700
        %v705 = vpack.c.b16 %v704, %v703
        %v707 = vmul.bf16 %v648, %v705
        %v708 = vmul.bf16 %v660, %v705
        %v709 = vmul.bf16 %v672, %v705
        %v710 = vmul.bf16 %v684, %v705
        %v711 = vadd.bf16 %v629, %v707
        %v712 = vadd.bf16 %v630, %v708
        %v713 = vadd.bf16 %v631, %v709
        %v714 = vadd.bf16 %v632, %v710
        %v715 = vld [vmem:[#allocation9] sm:$0xf]
        %v716 = vld [vmem:[#allocation9 + $0x4] sm:$0xf]
        %v717 = vld [vmem:[#allocation9 + $0x8] sm:$0xf]
        %v718 = vld [vmem:[#allocation9 + $0xc] sm:$0xf]
        %720 = vset.pattern.permute.xlu0 0
        %721 = vperm.xlu0 %720, %v715
        %v722 = vpop.permute.xlu0 %721
        %v725 = vunpack.c.l.s4 839922192
        %v726 = vunpack.c.0.s8 %v725
        %v727 = vlaneseq
        %v728 = vshrl.u32 %v727, 7
        %v729 = vsub.s32 %v726, %v728
        %v730 = vrot.slane %v722, %v729
        %732 = vset.pattern.permute.xlu0 0
        %733 = vperm.xlu0 %732, %v716
        %v734 = vpop.permute.xlu0 %733
        %v737 = vunpack.c.l.s4 839922192
        %v738 = vunpack.c.0.s8 %v737
        %v739 = vlaneseq
        %v740 = vshrl.u32 %v739, 7
        %v741 = vsub.s32 %v738, %v740
        %v742 = vrot.slane %v734, %v741
        %744 = vset.pattern.permute.xlu0 0
        %745 = vperm.xlu0 %744, %v717
        %v746 = vpop.permute.xlu0 %745
        %v749 = vunpack.c.l.s4 839922192
        %v750 = vunpack.c.0.s8 %v749
        %v751 = vlaneseq
        %v752 = vshrl.u32 %v751, 7
        %v753 = vsub.s32 %v750, %v752
        %v754 = vrot.slane %v746, %v753
        %756 = vset.pattern.permute.xlu0 0
        %757 = vperm.xlu0 %756, %v718
        %v758 = vpop.permute.xlu0 %757
        %v761 = vunpack.c.l.s4 839922192
        %v762 = vunpack.c.0.s8 %v761
        %v763 = vlaneseq
        %v764 = vshrl.u32 %v763, 7
        %v765 = vsub.s32 %v762, %v764
        %v766 = vrot.slane %v758, %v765
        %v768 = vpack.i.b16 %v542, %v542
        %v770 = vlaneseq
        %v771 = vshrl.u32 %v770, 7
        %v772 = vsub.s32 0, %v771
        %v773 = vrot.slane %v768, %v772
        %v775 = vpack.i.b16 %v543, %v543
        %v777 = vlaneseq
        %v778 = vshrl.u32 %v777, 7
        %v779 = vsub.s32 0, %v778
        %v780 = vrot.slane %v775, %v779
        %v783 = vunpack.c.l.b16 %v773
        %v784 = vunpack.c.l.b16 %v780
        %v785 = vpack.c.b16 %v784, %v783
        %v787 = vmul.bf16 %v730, %v785
        %v788 = vmul.bf16 %v742, %v785
        %v789 = vmul.bf16 %v754, %v785
        %v790 = vmul.bf16 %v766, %v785
        %v791 = vadd.bf16 %v711, %v787
        %v792 = vadd.bf16 %v712, %v788
        %v793 = vadd.bf16 %v713, %v789
        %v794 = vadd.bf16 %v714, %v790
        %v795 = vld [vmem:[#allocation11] sm:$0xf]
        %v796 = vld [vmem:[#allocation11 + $0x4] sm:$0xf]
        %v797 = vld [vmem:[#allocation11 + $0x8] sm:$0xf]
        %v798 = vld [vmem:[#allocation11 + $0xc] sm:$0xf]
        %800 = vset.pattern.permute.xlu0 0
        %801 = vperm.xlu0 %800, %v795
        %v802 = vpop.permute.xlu0 %801
        %v805 = vunpack.c.l.s4 839922192
        %v806 = vunpack.c.0.s8 %v805
        %v807 = vlaneseq
        %v808 = vshrl.u32 %v807, 7
        %v809 = vsub.s32 %v806, %v808
        %v810 = vrot.slane %v802, %v809
        %812 = vset.pattern.permute.xlu0 0
        %813 = vperm.xlu0 %812, %v796
        %v814 = vpop.permute.xlu0 %813
        %v817 = vunpack.c.l.s4 839922192
        %v818 = vunpack.c.0.s8 %v817
        %v819 = vlaneseq
        %v820 = vshrl.u32 %v819, 7
        %v821 = vsub.s32 %v818, %v820
        %v822 = vrot.slane %v814, %v821
        %824 = vset.pattern.permute.xlu0 0
        %825 = vperm.xlu0 %824, %v797
        %v826 = vpop.permute.xlu0 %825
        %v829 = vunpack.c.l.s4 839922192
        %v830 = vunpack.c.0.s8 %v829
        %v831 = vlaneseq
        %v832 = vshrl.u32 %v831, 7
        %v833 = vsub.s32 %v830, %v832
        %v834 = vrot.slane %v826, %v833
        %836 = vset.pattern.permute.xlu0 0
        %837 = vperm.xlu0 %836, %v798
        %v838 = vpop.permute.xlu0 %837
        %v841 = vunpack.c.l.s4 839922192
        %v842 = vunpack.c.0.s8 %v841
        %v843 = vlaneseq
        %v844 = vshrl.u32 %v843, 7
        %v845 = vsub.s32 %v842, %v844
        %v846 = vrot.slane %v838, %v845
        %v848 = vshrl.u32 %v555, 16
        %v849 = vpack.i.b16 %v848, %v848
        %v851 = vlaneseq
        %v852 = vshrl.u32 %v851, 7
        %v853 = vsub.s32 0, %v852
        %v854 = vrot.slane %v849, %v853
        %v856 = vshrl.u32 %v556, 16
        %v857 = vpack.i.b16 %v856, %v856
        %v859 = vlaneseq
        %v860 = vshrl.u32 %v859, 7
        %v861 = vsub.s32 0, %v860
        %v862 = vrot.slane %v857, %v861
        %v865 = vunpack.c.l.b16 %v854
        %v866 = vunpack.c.l.b16 %v862
        %v867 = vpack.c.b16 %v866, %v865
        %v869 = vmul.bf16 %v810, %v867
        %v870 = vmul.bf16 %v822, %v867
        %v871 = vmul.bf16 %v834, %v867
        %v872 = vmul.bf16 %v846, %v867
        %v873 = vadd.bf16 %v791, %v869
        %v874 = vadd.bf16 %v792, %v870
        %v875 = vadd.bf16 %v793, %v871
        %v876 = vadd.bf16 %v794, %v872
        %v877 = vld [vmem:[#allocation12] sm:$0xf]
        %v878 = vld [vmem:[#allocation12 + $0x4] sm:$0xf]
        %v879 = vld [vmem:[#allocation12 + $0x8] sm:$0xf]
        %v880 = vld [vmem:[#allocation12 + $0xc] sm:$0xf]
        %882 = vset.pattern.permute.xlu0 0
        %883 = vperm.xlu0 %882, %v877
        %v884 = vpop.permute.xlu0 %883
        %v887 = vunpack.c.l.s4 839922192
        %v888 = vunpack.c.0.s8 %v887
        %v889 = vlaneseq
        %v890 = vshrl.u32 %v889, 7
        %v891 = vsub.s32 %v888, %v890
        %v892 = vrot.slane %v884, %v891
        %894 = vset.pattern.permute.xlu0 0
        %895 = vperm.xlu0 %894, %v878
        %v896 = vpop.permute.xlu0 %895
        %v899 = vunpack.c.l.s4 839922192
        %v900 = vunpack.c.0.s8 %v899
        %v901 = vlaneseq
        %v902 = vshrl.u32 %v901, 7
        %v903 = vsub.s32 %v900, %v902
        %v904 = vrot.slane %v896, %v903
        %906 = vset.pattern.permute.xlu0 0
        %907 = vperm.xlu0 %906, %v879
        %v908 = vpop.permute.xlu0 %907
        %v911 = vunpack.c.l.s4 839922192
        %v912 = vunpack.c.0.s8 %v911
        %v913 = vlaneseq
        %v914 = vshrl.u32 %v913, 7
        %v915 = vsub.s32 %v912, %v914
        %v916 = vrot.slane %v908, %v915
        %918 = vset.pattern.permute.xlu0 0
        %919 = vperm.xlu0 %918, %v880
        %v920 = vpop.permute.xlu0 %919
        %v923 = vunpack.c.l.s4 839922192
        %v924 = vunpack.c.0.s8 %v923
        %v925 = vlaneseq
        %v926 = vshrl.u32 %v925, 7
        %v927 = vsub.s32 %v924, %v926
        %v928 = vrot.slane %v920, %v927
        %v929 = vadd.bf16 %v873, %v892
        %v930 = vadd.bf16 %v874, %v904
        %v931 = vadd.bf16 %v875, %v916
        %v932 = vadd.bf16 %v876, %v928
        %v933 = vmul.bf16 %v929, 1045249613
        %v934 = vmul.bf16 %v930, 1045249613
        %v935 = vmul.bf16 %v931, 1045249613
        %v936 = vmul.bf16 %v932, 1045249613
        %v937 = vmax.bf16 %v929, %v933
        %v938 = vmax.bf16 %v930, %v934
        %v939 = vmax.bf16 %v931, %v935
        %v940 = vmax.bf16 %v932, %v936
        %v941 = vld [vmem:[#allocation14] sm:$0xf]
        %v942 = vld [vmem:[#allocation14 + $0x4] sm:$0xf]
        %v943 = vld [vmem:[#allocation14 + $0x8] sm:$0xf]
        %v944 = vld [vmem:[#allocation14 + $0xc] sm:$0xf]
        %v945 = vld [vmem:[#allocation15] sm:$0xff]
        %v946 = vld [vmem:[#allocation15 + $0x8] sm:$0xff]
        %v947 = vld [vmem:[#allocation15 + $0x10] sm:$0xff]
        %v948 = vld [vmem:[#allocation15 + $0x18] sm:$0xff]
        %950 = vset.pattern.permute.xlu0 0
        %951 = vperm.xlu0 %950, %v945
        %v952 = vpop.permute.xlu0 %951
        %955 = vset.pattern.permute.xlu0 0
        %956 = vperm.xlu0 %955, %v946
        %v957 = vpop.permute.xlu0 %956
        %960 = vset.pattern.permute.xlu0 0
        %961 = vperm.xlu0 %960, %v947
        %v962 = vpop.permute.xlu0 %961
        %965 = vset.pattern.permute.xlu0 0
        %966 = vperm.xlu0 %965, %v948
        %v967 = vpop.permute.xlu0 %966
        %v973 = vunpack.c.l.b16 %v941
        %v974 = vunpack.c.l.b16 %v942
        %v975 = vunpack.c.l.b16 %v943
        %v976 = vunpack.c.l.b16 %v944
        %v977 = vpack.c.b16 %v974, %v973
        %v978 = vpack.c.b16 %v976, %v975
        %v983 = vunpack.c.l.b16 %v937
        %v984 = vunpack.c.h.b16 %v937
        %v985 = vunpack.c.l.b16 %v938
        %v986 = vunpack.c.h.b16 %v938
        %v987 = vunpack.c.l.b16 %v939
        %v988 = vunpack.c.h.b16 %v939
        %v989 = vunpack.c.l.b16 %v940
        %v990 = vunpack.c.h.b16 %v940
        %v991 = vpack.c.b16 %v985, %v983
        %v992 = vpack.c.b16 %v986, %v984
        %v993 = vpack.c.b16 %v989, %v987
        %v994 = vpack.c.b16 %v990, %v988
        %vm999 = vcmask 261120
        %v1001 = vsel %vm999, %v977, 0
        %v1004 = vsel %vm999, %v978, 0
        %1006 = vmatprep.subr.bf16.mxu0 %v992
        %1007 = vmatpush1.bf16.msra.mxu0 %v991
        %1008 = vmatprep.subr.bf16.mxu0 %v994
        %1009 = vmatpush1.bf16.msra.mxu0 %v993
        %1010 = vmatprep.subr.bf16.mxu0 0
        %1011 = vmatpush1.bf16.msra.mxu0 0
        %1012 = vmatprep.subr.bf16.mxu0 0
        %1013 = vmatpush1.bf16.msra.mxu0 0
        %1014 = vmatprep.subr.bf16.mxu0 0
        %1015 = vmatpush1.bf16.msra.mxu0 0
        %1016 = vmatprep.subr.bf16.mxu0 0
        %1017 = vmatpush1.bf16.msra.mxu0 0
        %1018 = vmatprep.subr.bf16.mxu0 0
        %1019 = vmatpush1.bf16.msra.mxu0 0
        %1020 = vmatprep.subr.bf16.mxu0 0
        %1021 = vmatpush1.bf16.msra.mxu0 0
        %1022 = vmatprep.subr.bf16.mxu0 0
        %1023 = vmatpush1.bf16.msra.mxu0 0
        %1024 = vmatprep.subr.bf16.mxu0 0
        %1025 = vmatpush1.bf16.msra.mxu0 0
        %1026 = vmatprep.subr.bf16.mxu0 0
        %1027 = vmatpush1.bf16.msra.mxu0 0
        %1028 = vmatprep.subr.bf16.mxu0 0
        %1029 = vmatpush1.bf16.msra.mxu0 0
        %1030 = vmatprep.subr.bf16.mxu0 0
        %1031 = vmatpush1.bf16.msra.mxu0 0
        %1032 = vmatprep.subr.bf16.mxu0 0
        %1033 = vmatpush1.bf16.msra.mxu0 0
        %1034 = vmatprep.subr.bf16.mxu0 0
        %1035 = vmatpush1.bf16.msra.mxu0 0
        %1036 = vmatprep.subr.bf16.mxu0 0
        %1037 = vmatpush1.bf16.msra.mxu0 0
        %1038 = vmatprep.mubr.bf16.mxu0 0
        %1039 = vmatmul.mubr.bf16.gmra.mrb[0].mxu0 %v1001
        %v1040 = vpop.f32.mrb[0].mxu0
        %v1041 = vadd.f32 %v952, %v1040
        %v1042 = vpop.f32.mrb[0].mxu0
        %v1043 = vadd.f32 %v952, %v1042
        %v1044 = vpop.f32.mrb[0].mxu0
        %v1045 = vadd.f32 %v957, %v1044
        %v1046 = vpop.f32.mrb[0].mxu0
        %v1047 = vadd.f32 %v957, %v1046
        %1048 = vmatprep.mubr.bf16.mxu0 0
        %1049 = vmatmul.mubr.bf16.gmra.mrb[0].mxu0 %v1004
        %v1050 = vpop.f32.mrb[0].mxu0
        %v1051 = vadd.f32 %v962, %v1050
        %v1052 = vpop.f32.mrb[0].mxu0
        %v1053 = vadd.f32 %v962, %v1052
        %v1054 = vpop.f32.mrb[0].mxu0
        %v1055 = vadd.f32 %v967, %v1054
        %v1056 = vpop.f32.mrb[0].mxu0
        %v1057 = vadd.f32 %v967, %v1056
        %1058 = vdwg.mxu0
        %v1059 = vpack.c.bf16 %v1045, %v1041
        %v1060 = vpack.c.bf16 %v1047, %v1043
        %v1061 = vpack.c.bf16 %v1055, %v1051
        %v1062 = vpack.c.bf16 %v1057, %v1053
        %v1063 = vmul.bf16 %v1059, 1045249613
        %v1064 = vmul.bf16 %v1060, 1045249613
        %v1065 = vmul.bf16 %v1061, 1045249613
        %v1066 = vmul.bf16 %v1062, 1045249613
        %v1067 = vmax.bf16 %v1059, %v1063
        %v1068 = vmax.bf16 %v1060, %v1064
        %v1069 = vmax.bf16 %v1061, %v1065
        %v1070 = vmax.bf16 %v1062, %v1066
        %v1071 = vld [vmem:[#allocation17] sm:$0x1]
        %v1072 = vld [vmem:[#allocation2] sm:$0x1]
        %1074 = vset.pattern.permute.xlu0 0
        %1075 = vperm.xlu0 %1074, %v1072
        %v1076 = vpop.permute.xlu0 %1075
        %v1078 = vlaneseq
        %v1079 = vshrl.u32 %v1078, 7
        %v1080 = vsub.s32 0, %v1079
        %v1081 = vrot.slane %v1076, %v1080
        %v1083 = vsel %vm999, %v1071, 0
        %1085 = vmatprep.subr.bf16.mxu0 %v1068
        %1086 = vmatpush1.bf16.msra.mxu0 %v1067
        %1087 = vmatprep.subr.bf16.mxu0 %v1070
        %1088 = vmatpush1.bf16.msra.mxu0 %v1069
        %1089 = vmatprep.subr.bf16.mxu0 0
        %1090 = vmatpush1.bf16.msra.mxu0 0
        %1091 = vmatprep.subr.bf16.mxu0 0
        %1092 = vmatpush1.bf16.msra.mxu0 0
        %1093 = vmatprep.subr.bf16.mxu0 0
        %1094 = vmatpush1.bf16.msra.mxu0 0
        %1095 = vmatprep.subr.bf16.mxu0 0
        %1096 = vmatpush1.bf16.msra.mxu0 0
        %1097 = vmatprep.subr.bf16.mxu0 0
        %1098 = vmatpush1.bf16.msra.mxu0 0
        %1099 = vmatprep.subr.bf16.mxu0 0
        %1100 = vmatpush1.bf16.msra.mxu0 0
        %1101 = vmatprep.subr.bf16.mxu0 0
        %1102 = vmatpush1.bf16.msra.mxu0 0
        %1103 = vmatprep.subr.bf16.mxu0 0
        %1104 = vmatpush1.bf16.msra.mxu0 0
        %1105 = vmatprep.subr.bf16.mxu0 0
        %1106 = vmatpush1.bf16.msra.mxu0 0
        %1107 = vmatprep.subr.bf16.mxu0 0
        %1108 = vmatpush1.bf16.msra.mxu0 0
        %1109 = vmatprep.subr.bf16.mxu0 0
        %1110 = vmatpush1.bf16.msra.mxu0 0
        %1111 = vmatprep.subr.bf16.mxu0 0
        %1112 = vmatpush1.bf16.msra.mxu0 0
        %1113 = vmatprep.subr.bf16.mxu0 0
        %1114 = vmatpush1.bf16.msra.mxu0 0
        %1115 = vmatprep.subr.bf16.mxu0 0
        %1116 = vmatpush1.bf16.msra.mxu0 0
        %1117 = vmatprep.mubr.bf16.mxu0 0
        %1118 = vmatmul.mubr.bf16.gmra.mrb[0].mxu0 %v1083
        %v1119 = vpop.f32.mrb[0].mxu0
        %v1120 = vadd.f32 %v1081, %v1119
        %v1121 = vpop.f32.mrb[0].mxu0
        %v1122 = vadd.f32 %v1081, %v1121
        %v1123 = vpop.f32.mrb[0].mxu0
        %v1124 = vpop.f32.mrb[0].mxu0
        %1125 = vdwg.mxu0
        %v1126 = vxor.u32 %v1120, 2147483648
        %v1127 = vxor.u32 %v1122, 2147483648
        %v1128 = vmul.f32 %v1126, 1.442695
        %v1129 = vpow.pop %v1128
        %v1130 = vmul.f32 %v1127, 1.442695
        %v1131 = vpow.pop %v1130
        %v1132 = vadd.f32 %v1129, 1.0
        %v1133 = vadd.f32 %v1131, 1.0
        %v1134 = vrcp.pop %v1132
        %v1135 = vmul.f32 1.0, %v1134
        %v1136 = vrcp.pop %v1133
        %v1137 = vmul.f32 1.0, %v1136
        %v1140 = vcombine.low %v1135, %v1137
        %v1142 = vunpack.c.l.s4 1966171168
        %v1143 = vunpack.c.0.s8 %v1142
        %v1144 = vlaneseq
        %v1145 = vshrl.u32 %v1144, 7
        %v1146 = vsub.s32 %v1143, %v1145
        %v1147 = vrot.slane %v1140, %v1146
        %v1149 = vunpack.c.l.s4 1966171168
        %v1150 = vunpack.c.0.s8 %v1149
        %v1151 = vlaneseq
        %v1152 = vshrl.u32 %v1151, 7
        %v1153 = vsub.s32 %v1150, %v1152
        %v1154 = vrot.slane %v1147, %v1153
        %v1156 = vlaneseq
        %vm1157 = vcmp.ge.s32.totalorder %v1156, 0
        %vm1158 = vcmp.lt.s32.totalorder %v1156, 256
        %vm1159 = vmand %vm1157, %vm1158
        %1160 = vst.msk [vmem:[%s491] sm:$0x3] %vm1159, %v1154
        %s1161 = sand.u32 %s256, 1
        %s1162 = scalar_lea.sflag [#allocation5], %s1161
        %s1163 = sand.u32 %s256, 1
        %s1164 = smul.addr %s1163, 2
        %s1165 = scalar_lea.vmem [#allocation18], %s1164
        // Predicated region
        $region97: #{_dist2logit_impl.1} parent=59 // pred_check
          %p1166 = pneg %p266
        $region98: #{_dist2logit_impl.1} parent=59 // pred_check_branch
          %1168 = sbr.rel (%p1166) target = $region100
        $region99: #{_dist2logit_impl.1} parent=59 // pred_region
          %s1169 = smul.u32 2, %s33
          %s1171 = ssub.s32 32, 32
          %1172 = vsyncadd %s1162, %s1171
          %s1173 = smul.addr %s1169, 16
          %s1174 = scalar_lea.hbm %s10, %s1173
          %s1176 = sshll.u32 %s1165, 4
          %s1177 = int_to_ptr.vmem [resolvable:$true] %s1176
          %1179 = dma.vmem_to_hbm [thread:$0]  %s1177, 32, %s1174, %s1162
        $region100: #{_dist2logit_impl.1} parent=59 // pred_fallthru
          _
      $region60: #{_dist2logit_impl.1} parent=5 // pred_fallthru
        _
      %p1180 = scmp.le.s32.totalorder 2, %s28
      // Predicated region
      $region101: #{_dist2logit_impl.1} parent=5 // pred_check
        %p1181 = pneg %p1180
      $region102: #{_dist2logit_impl.1} parent=5 // pred_check_branch
        %1183 = sbr.rel (%p1181) target = $region104
      $region103: #{_dist2logit_impl.1} parent=5 // pred_region
        %s1184 = ssub.s32 %s28, 2
        // Predicated region
        $region105: #{_dist2logit_impl.1} parent=103 // pred_check
          %p1185 = pneg %p272
        $region106: #{_dist2logit_impl.1} parent=103 // pred_check_branch
          %1187 = sbr.rel (%p1185) target = $region108
        $region107: #{_dist2logit_impl.1} parent=103 // pred_region
          %s1188 = sand.u32 %s257, 1
          %s1189 = scalar_lea.sflag [#allocation5], %s1188
          %s1190 = sand.u32 %s257, 1
          %s1191 = smul.addr %s1190, 2
          %s1192 = scalar_lea.vmem [#allocation18], %s1191
          %1193 = dma.done %s1189, 32
        $region108: #{_dist2logit_impl.1} parent=103 // pred_fallthru
          _
      $region104: #{_dist2logit_impl.1} parent=5 // pred_fallthru
        _
    $region6: #{_dist2logit_impl.1} parent=1 // loop_footer
      %s32 = sadd.s32 1, %s28
    $region7: #{_dist2logit_impl.1} parent=1 // loop_footer_branch
      %27 = sbr.rel target = $region3
    $region8: #{_dist2logit_impl.1} parent=1 // loop_exit
      _
    %1194 = vsyncpa [#allocation4], 1
    %s1195 = scalar_lea.sflag [#allocation4], 1
    %1196 = vsyncpa %s1195, 1
    %1197 = vsyncpa [#allocation7], 1
    %1198 = vsyncpa [#allocation10], 1
    %1199 = vsyncpa [#allocation13], 1
    %1200 = vsyncpa [#allocation16], 1
    %1201 = vsyncpa [#allocation5], 1
    %s1202 = scalar_lea.sflag [#allocation5], 1
    %1203 = vsyncpa %s1202, 1

</llo_original>
